<compile_context>
chip_gen: v5e
topology: v5e:2x2
jax: 0.10.0
libtpu: 0.0.40
codegen_flags: <defaults>
</compile_context>

<pallas_src>
import jax
import jax.numpy as jnp
from jax.experimental import pallas as pl
from jax.experimental.pallas import tpu as pltpu


def _logreg_kernel(x_ref, w_ref, b_ref, o_ref):
    # x_ref: (TB, Fp) f32, pipelined over batch tiles
    # w_ref: (Fp, Op) f32, VMEM-resident across the whole grid
    # b_ref: (1,  Op) f32, VMEM-resident across the whole grid
    # o_ref: (TB, Op) out dtype
    logits = jnp.dot(x_ref[...], w_ref[...], preferred_element_type=jnp.float32)
    logits = logits + b_ref[...]  # broadcast bias over rows

    # sigmoid(z) = 1 / (1 + exp(-z)); clamp keeps exp in range, exact at f32
    # output precision (sigmoid saturates well before |30|).
    z = jnp.clip(logits, -30.0, 30.0)
    denom = 1.0 + jnp.exp(-z)                   # exp on the EUP
    recip = pl.reciprocal(denom, approx=True)   # approx reciprocal on the EUP
    recip = recip * (2.0 - denom * recip)       # one Newton step -> f32 accuracy
    o_ref[...] = recip.astype(o_ref.dtype)


def logistic_regression(x, weight, bias, *, block_rows=None,
                        out_dtype=jnp.float32,
                        vmem_budget_bytes=12 * 1024 * 1024,
                        vmem_limit_bytes=None,
                        core_parallel=False):
    """y = sigmoid(x @ weight.T + bias) via a batch-tiled, lane-dense Pallas kernel.

    Args:
      x:       (B, F) float array.
      weight:  (O, F) array (PyTorch nn.Linear layout).
      bias:    (O,)   array.
      block_rows: rows (of the *folded* problem) per grid step; None -> derive
                  from vmem_budget_bytes.
      out_dtype: output dtype (e.g. jnp.bfloat16 to halve writeback traffic).
      vmem_budget_bytes: budget for the double-buffered x+out tiles (keep it
                  under the scoped-VMEM default: 16 MiB v5e, 32 MiB v6e/v7x).
      vmem_limit_bytes: optionally raise the scoped VMEM limit for huge tiles.
      core_parallel: use pltpu.CORE_PARALLEL on the batch axis (v7x, 2 TCs).
    """
    B, F = x.shape
    O, F2 = weight.shape
    assert F == F2, "weight must be (n_regroutput, n_feature)"

    w_fo = jnp.asarray(weight, jnp.float32).T          # (F, O)
    b_row = jnp.asarray(bias, jnp.float32).reshape(1, O)
    x_f32 = jnp.asarray(x, jnp.float32)

    # ---- lane-dense fold: pack `fold` batch rows into the lane dimension ----
    fold = 1
    if O < 128 and (128 % O == 0):
        cand = 128 // O
        blockdiag_bytes = (cand * F) * (cand * O) * 4
        if B % cand == 0 and blockdiag_bytes <= (4 << 20):
            fold = cand

    if fold > 1:
        Fp, Op = fold * F, fold * O                    # e.g. 512, 128
        Bp = B // fold
        x_in = x_f32.reshape(Bp, Fp)                   # free reshape (row-major)
        # Block-diagonal weight: `fold` copies of (F, O) along the diagonal.
        eye = jnp.eye(fold, dtype=jnp.float32)
        w_in = jnp.einsum("ij,fo->ifjo", eye, w_fo).reshape(Fp, Op)
        b_in = jnp.tile(b_row, (1, fold))              # (1, Op)
    else:
        Fp, Op = F, O
        Bp = B
        x_in, w_in, b_in = x_f32, w_fo, b_row

    # ---- batch tile from VMEM budget (x + out, each double-buffered) ----
    bytes_per_row = 2 * (Fp * 4 + Op * jnp.dtype(out_dtype).itemsize)
    if block_rows is None:
        tb = min(Bp, max(8, vmem_budget_bytes // bytes_per_row))
    else:
        tb = min(block_rows, Bp)
    if tb < Bp:
        tb = max(8, (tb // 8) * 8)                     # multiple of 8 sublanes
    grid = (pl.cdiv(Bp, tb),)

    batch_sem = pltpu.CORE_PARALLEL if core_parallel else "parallel"

    out = pl.pallas_call(
        _logreg_kernel,
        out_shape=jax.ShapeDtypeStruct((Bp, Op), out_dtype),
        grid=grid,
        in_specs=[
            # x: pipelined over the batch axis (double-buffered DMA).
            pl.BlockSpec((tb, Fp), lambda i: (i, 0)),
            # weight / bias: constant block index -> fetched once, VMEM-resident.
            pl.BlockSpec((Fp, Op), lambda i: (0, 0)),
            pl.BlockSpec((1, Op), lambda i: (0, 0)),
        ],
        out_specs=pl.BlockSpec((tb, Op), lambda i: (i, 0)),
        compiler_params=pltpu.CompilerParams(
            dimension_semantics=(batch_sem,),
            vmem_limit_bytes=vmem_limit_bytes,
        ),
    )(x_in, w_in, b_in)

    if fold > 1:
        out = out.reshape(B, O)                        # undo the fold (free)
    return out


def _xavier_uniform(key, shape, dtype=jnp.float32):
    fan_out, fan_in = shape
    limit = jnp.sqrt(6.0 / (fan_in + fan_out))
    return jax.random.uniform(key, shape, dtype, minval=-limit, maxval=limit)


if __name__ == "__main__":
    n_feature = 32
    n_regroutput = 8
    batch = 512  # small, but enough rows to exercise the fold + batch tiling

    key = jax.random.PRNGKey(0)
    kx, kw = jax.random.split(key)

    x = jax.random.normal(kx, (batch, n_feature), dtype=jnp.float32)
    # Deterministic params mirroring Net.init_weights: xavier_uniform weight in
    # the PyTorch (O, F) layout, bias filled with 0.01.
    weight = _xavier_uniform(kw, (n_regroutput, n_feature))
    bias = jnp.full((n_regroutput,), 0.01, dtype=jnp.float32)

    # fold=16 -> folded problem is (32, 512) x (512, 128); block_rows=8 gives a
    # grid of 4 lane-dense batch tiles.  (For production: leave block_rows=None
    # so the tile is sized from the VMEM budget, and consider out_dtype=bf16.)
    out = logistic_regression(x, weight, bias, block_rows=8)
    out = jax.block_until_ready(out)

    # Reference check in plain JAX.
    ref = jax.nn.sigmoid(x @ weight.T + bias)
    assert out.shape == (batch, n_regroutput)
    assert jnp.allclose(out, ref, atol=1e-4, rtol=1e-4), "mismatch vs reference"

    # Also check a ragged / non-foldable batch (falls back to the plain path).
    xr = jax.random.normal(kx, (37, n_feature), dtype=jnp.float32)
    out_r = jax.block_until_ready(logistic_regression(xr, weight, bias, block_rows=16))
    ref_r = jax.nn.sigmoid(xr @ weight.T + bias)
    assert jnp.allclose(out_r, ref_r, atol=1e-4, rtol=1e-4), "ragged mismatch"

    print("KERNEL_OK")
</pallas_src>

<mosaic_0001>
module attributes {stable_mosaic.version = 11 : i64} {
  func.func @_logreg_kernel(%arg0: i32, %arg1: memref<8x512xf32, #tpu.memory_space<vmem>>, %arg2: memref<512x128xf32, #tpu.memory_space<vmem>>, %arg3: memref<1x128xf32, #tpu.memory_space<vmem>>, %arg4: memref<8x128xf32, #tpu.memory_space<vmem>>) attributes {dimension_semantics = [#tpu.dimension_semantics<parallel>], iteration_bounds = array<i64: 4>, scalar_prefetch = 0 : i64, scratch_operands = 0 : i64, tpu.core_type = #tpu.core_type<tc>, window_params = [{transform_indices = @transform_0, window_bounds = array<i64: 8, 512>}, {pipeline_mode = #tpu.pipeline_mode<synchronous>, transform_indices = @transform_1, window_bounds = array<i64: 512, 128>}, {pipeline_mode = #tpu.pipeline_mode<synchronous>, transform_indices = @transform_2, window_bounds = array<i64: 1, 128>}, {transform_indices = @transform_3, window_bounds = array<i64: 8, 128>}]} {
    %c0 = arith.constant 0 : index
    %c0_0 = arith.constant 0 : index
    %0 = vector.load %arg1[%c0, %c0_0] : memref<8x512xf32, #tpu.memory_space<vmem>>, vector<8x512xf32>
    %c0_1 = arith.constant 0 : index
    %c0_2 = arith.constant 0 : index
    %1 = vector.load %arg2[%c0_1, %c0_2] : memref<512x128xf32, #tpu.memory_space<vmem>>, vector<512x128xf32>
    %cst = arith.constant dense<0.000000e+00> : vector<8x128xf32>
    %2 = tpu.matmul %0, %1, %cst {dimension_numbers = #tpu.dot_dimension_numbers<[1], [0], [0], [1], [0, 0, 1, 1], [], []>} : vector<8x512xf32>, vector<512x128xf32>, vector<8x128xf32> -> vector<8x128xf32>
    %c0_3 = arith.constant 0 : index
    %c0_4 = arith.constant 0 : index
    %3 = vector.load %arg3[%c0_3, %c0_4] : memref<1x128xf32, #tpu.memory_space<vmem>>, vector<1x128xf32>
    %4 = vector.broadcast %3 : vector<1x128xf32> to vector<8x128xf32>
    %5 = arith.addf %2, %4 : vector<8x128xf32>
    %cst_5 = arith.constant -3.000000e+01 : f32
    %cst_6 = arith.constant 3.000000e+01 : f32
    %6 = vector.broadcast %cst_5 : f32 to vector<8x128xf32>
    %7 = arith.maximumf %6, %5 : vector<8x128xf32>
    %8 = vector.broadcast %cst_6 : f32 to vector<8x128xf32>
    %9 = arith.minimumf %8, %7 : vector<8x128xf32>
    %cst_7 = arith.constant 0.000000e+00 : f32
    %10 = vector.broadcast %cst_7 : f32 to vector<8x128xf32>
    %11 = arith.subf %10, %9 : vector<8x128xf32>
    %12 = math.exp %11 : vector<8x128xf32>
    %cst_8 = arith.constant 1.000000e+00 : f32
    %13 = vector.broadcast %cst_8 : f32 to vector<8x128xf32>
    %14 = arith.addf %13, %12 : vector<8x128xf32>
    %15 = tpu.reciprocal %14 {approx = true} : vector<8x128xf32> -> vector<8x128xf32>
    %16 = arith.mulf %14, %15 : vector<8x128xf32>
    %cst_9 = arith.constant 2.000000e+00 : f32
    %17 = vector.broadcast %cst_9 : f32 to vector<8x128xf32>
    %18 = arith.subf %17, %16 : vector<8x128xf32>
    %19 = arith.mulf %15, %18 : vector<8x128xf32>
    %c0_10 = arith.constant 0 : index
    %c0_11 = arith.constant 0 : index
    %20 = vector.load %arg4[%c0_10, %c0_11] : memref<8x128xf32, #tpu.memory_space<vmem>>, vector<8x128xf32>
    tpu.vector_store %arg4[%c0_10, %c0_11], %19 {strides = array<i32>} : memref<8x128xf32, #tpu.memory_space<vmem>>, vector<8x128xf32>,
    return
  }
  func.func @transform_0(%arg0: i32) -> (i32, i32) {
    %c0_i32 = arith.constant 0 : i32
    %c0_i32_0 = arith.constant 0 : i32
    return %arg0, %c0_i32 : i32, i32
  }
  func.func @transform_1(%arg0: i32) -> (i32, i32) {
    %c0_i32 = arith.constant 0 : i32
    %c0_i32_0 = arith.constant 0 : i32
    %c0_i32_1 = arith.constant 0 : i32
    return %c0_i32, %c0_i32_0 : i32, i32
  }
  func.func @transform_2(%arg0: i32) -> (i32, i32) {
    %c0_i32 = arith.constant 0 : i32
    %c0_i32_0 = arith.constant 0 : i32
    %c0_i32_1 = arith.constant 0 : i32
    return %c0_i32, %c0_i32_0 : i32, i32
  }
  func.func @transform_3(%arg0: i32) -> (i32, i32) {
    %c0_i32 = arith.constant 0 : i32
    %c0_i32_0 = arith.constant 0 : i32
    return %arg0, %c0_i32 : i32, i32
  }
}

</mosaic_0001>

<llo_original>
// kernel: tpu_custom_call.1
$region0: #{tpu_custom_call.1}
  #allocation0 [shape = 'u32[]', space=smem, size = 0x4, offset = 0x4, fixed_abs, tag = 'smem constant byte address 0x4 - core index']
  #allocation1 [shape = 'u32[72,128]{1,0:T(1,128)}', space=vmem, size = 0x9000, scoped, tag = 'internal scratch']
  %s0 = inlined_call_operand.hbm [shape: f32[32,512], index: 0, kind: input, shape index: {}]
  %s1 = inlined_call_operand.hbm [shape: f32[512,128], index: 1, kind: input, shape index: {}]
  %s2 = inlined_call_operand.vmem [shape: f32[1,128], index: 2, kind: input, shape index: {}]
  %s3 = inlined_call_operand.hbm [shape: f32[32,128], index: 3, kind: output, shape index: {}]
  %s4 = sld [smem:[#allocation0]]
  $region53: #{tpu_custom_call.1} parent=0
    _
  %s6 = ssub.s32 1, %s4
  %s7 = scalar_select 0, %s6, %s4
  $region1: #{tpu_custom_call.1} parent=0
    #allocation2 [shape = 'u8[32768]{0}', space=vmem, size = 0x8000, scoped, tag = 'input window, operand 0']
    #allocation3 [shape = 's32[2]{0}', space=sflag, size = 0x8, scoped, tag = 'scoped memory for tpu_custom_call.1']
    #allocation4 [shape = 's32[2]{0}', space=sflag, size = 0x8, scoped, tag = 'scoped memory for tpu_custom_call.1']
    #allocation5 [shape = 'u8[262144]{0}', space=vmem, size = 0x40000, scoped, tag = 'input window, operand 1, single buffered']
    #allocation6 [shape = 's32[1]{0}', space=sflag, size = 0x4, scoped, tag = 'scoped memory for tpu_custom_call.1']
    #allocation7 [shape = 'u8[8192]{0}', space=vmem, size = 0x2000, scoped, tag = 'output window, operand 0']
    %8 = vsyncpa [#allocation3], 0
    %s9 = scalar_lea.sflag [#allocation3], 1
    %10 = vsyncpa %s9, 0
    %11 = vsyncpa [#allocation6], 0
    %12 = vsyncpa [#allocation4], 0
    %s13 = scalar_lea.sflag [#allocation4], 1
    %14 = vsyncpa %s13, 0
    loop: start=0, step=1, limit=6
    $region2: #{tpu_custom_call.1} parent=1 // loop_pre_header
      _
    $region3: #{tpu_custom_call.1} parent=1 // loop_header
      %s16 = sphi 0, %s20
      %p17 = scmp.ge.s32.totalorder %s16, 6
      %s26 = sphi 0, %s28
      %s29 = sphi 0, %s26
      %s30 = sphi 0, %s29
      %s46 = sphi 0, %s30
      %s50 = sphi 0, %s50
      %s52 = sphi 0, %s50
      %s53 = sphi 0, %s52
      %s67 = sphi 0, %s53
      %s71 = sphi 0, %s71
      %s73 = sphi 0, %s71
      %s74 = sphi 0, %s73
      %s88 = sphi 0, %s74
      %s94 = sphi 0, %s96
      %s97 = sphi 0, %s94
      %s98 = sphi 0, %s97
      %s114 = sphi 0, %s98
    $region4: #{tpu_custom_call.1} parent=1 // loop_header_branch
      %19 = sbr.rel (%p17) target = $region8
    $region5: #{tpu_custom_call.1} parent=1 // loop_body
      %s21 = ssub.s32 %s16, 1
      %s22 = ssub.s32 %s16, 2
      %s23 = sadd.s32 %s16, 1
      %s24 = ssub.s32 %s16, %s23
      %p25 = scmp.eq.s32.totalorder %s24, 0
      %s27 = sadd.s32 %s26, 1
      %s28 = scalar_select %p25, %s26, %s27
      %p31 = pneg %p25
      %p32 = scmp.eq.s32.totalorder %s16, 3
      %p33 = por %p31, %p32
      %p34 = scmp.ne.s32.totalorder %s26, %s29
      %p35 = scmp.eq.s32.totalorder %s16, 0
      %p36 = por %p34, %p35
      %p37 = scmp.ne.s32.totalorder %s26, %s29
      %p38 = scmp.eq.s32.totalorder %s21, 3
      %p39 = por %p37, %p38
      %p40 = scmp.ne.s32.totalorder %s29, %s30
      %p41 = scmp.eq.s32.totalorder %s21, 0
      %p42 = por %p40, %p41
      %p43 = scmp.ne.s32.totalorder %s29, %s30
      %p44 = scmp.eq.s32.totalorder %s22, 3
      %p45 = por %p43, %p44
      %p47 = scmp.ne.s32.totalorder %s30, %s46
      %p48 = scmp.eq.s32.totalorder %s22, 0
      %p49 = por %p47, %p48
      %s51 = sadd.s32 %s50, 1
      %p54 = scmp.eq.s32.totalorder %s16, 3
      %p55 = scmp.ne.s32.totalorder %s50, %s52
      %p56 = scmp.eq.s32.totalorder %s16, 0
      %p57 = por %p55, %p56
      %p58 = scmp.ne.s32.totalorder %s50, %s52
      %p59 = scmp.eq.s32.totalorder %s21, 3
      %p60 = por %p58, %p59
      %p61 = scmp.ne.s32.totalorder %s52, %s53
      %p62 = scmp.eq.s32.totalorder %s21, 0
      %p63 = por %p61, %p62
      %p64 = scmp.ne.s32.totalorder %s52, %s53
      %p65 = scmp.eq.s32.totalorder %s22, 3
      %p66 = por %p64, %p65
      %p68 = scmp.ne.s32.totalorder %s53, %s67
      %p69 = scmp.eq.s32.totalorder %s22, 0
      %p70 = por %p68, %p69
      %s72 = sadd.s32 %s71, 1
      %p75 = scmp.eq.s32.totalorder %s16, 3
      %p76 = scmp.ne.s32.totalorder %s71, %s73
      %p77 = scmp.eq.s32.totalorder %s16, 0
      %p78 = por %p76, %p77
      %p79 = scmp.ne.s32.totalorder %s71, %s73
      %p80 = scmp.eq.s32.totalorder %s21, 3
      %p81 = por %p79, %p80
      %p82 = scmp.ne.s32.totalorder %s73, %s74
      %p83 = scmp.eq.s32.totalorder %s21, 0
      %p84 = por %p82, %p83
      %p85 = scmp.ne.s32.totalorder %s73, %s74
      %p86 = scmp.eq.s32.totalorder %s22, 3
      %p87 = por %p85, %p86
      %p89 = scmp.ne.s32.totalorder %s74, %s88
      %p90 = scmp.eq.s32.totalorder %s22, 0
      %p91 = por %p89, %p90
      %s92 = ssub.s32 %s16, %s23
      %p93 = scmp.eq.s32.totalorder %s92, 0
      %s95 = sadd.s32 %s94, 1
      %s96 = scalar_select %p93, %s94, %s95
      %p99 = pneg %p93
      %p100 = scmp.eq.s32.totalorder %s16, 3
      %p101 = por %p99, %p100
      %p102 = scmp.ne.s32.totalorder %s94, %s97
      %p103 = scmp.eq.s32.totalorder %s16, 0
      %p104 = por %p102, %p103
      %p105 = scmp.ne.s32.totalorder %s94, %s97
      %p106 = scmp.eq.s32.totalorder %s21, 3
      %p107 = por %p105, %p106
      %p108 = scmp.ne.s32.totalorder %s97, %s98
      %p109 = scmp.eq.s32.totalorder %s21, 0
      %p110 = por %p108, %p109
      %p111 = scmp.ne.s32.totalorder %s97, %s98
      %p112 = scmp.eq.s32.totalorder %s22, 3
      %p113 = por %p111, %p112
      %p115 = scmp.ne.s32.totalorder %s98, %s114
      %p116 = scmp.eq.s32.totalorder %s22, 0
      %p117 = por %p115, %p116
      %p118 = scmp.le.s32.totalorder 1, %s16
      %p119 = scmp.lt.s32.totalorder %s16, 5
      %p120 = pnand %p118, %p119
      %p121 = pneg %p120
      // Predicated region
      $region9: #{tpu_custom_call.1} parent=5 // pred_check
        _
      $region10: #{tpu_custom_call.1} parent=5 // pred_check_branch
        %123 = sbr.rel (%p120) target = $region12
      $region11: #{tpu_custom_call.1} parent=5 // pred_region
        %s124 = ssub.s32 %s16, 1
        // Predicated region
        $region13: #{tpu_custom_call.1} parent=11 // pred_check
          %p125 = pneg %p63
        $region14: #{tpu_custom_call.1} parent=11 // pred_check_branch
          %127 = sbr.rel (%p125) target = $region16
        $region15: #{tpu_custom_call.1} parent=11 // pred_region
          %129 = vsyncadd [#allocation6], 0
          %s130 = sshll.u32 %s1, 4
          %s131 = int_to_ptr.hbm [resolvable:$true] %s130
          %s132 = sshll.u32 [#allocation5], 4
          %s133 = int_to_ptr.vmem [resolvable:$true] %s132
          %138 = dma.hbm_to_vmem [thread:$0]  %s131, 8192, %s133, [#allocation6], 128, 128, 8
        $region16: #{tpu_custom_call.1} parent=11 // pred_fallthru
          _
        // Predicated region
        $region17: #{tpu_custom_call.1} parent=11 // pred_check
          %p139 = pneg %p84
        $region18: #{tpu_custom_call.1} parent=11 // pred_check_branch
          %141 = sbr.rel (%p139) target = $region20
        $region19: #{tpu_custom_call.1} parent=11 // pred_region
          _
        $region20: #{tpu_custom_call.1} parent=11 // pred_fallthru
          _
      $region12: #{tpu_custom_call.1} parent=5 // pred_fallthru
        _
      %p142 = scmp.lt.s32.totalorder %s16, 4
      // Predicated region
      $region21: #{tpu_custom_call.1} parent=5 // pred_check
        %p143 = pneg %p142
      $region22: #{tpu_custom_call.1} parent=5 // pred_check_branch
        %145 = sbr.rel (%p143) target = $region24
      $region23: #{tpu_custom_call.1} parent=5 // pred_region
        // Predicated region
        $region25: #{tpu_custom_call.1} parent=23 // pred_check
          %p146 = pneg %p36
        $region26: #{tpu_custom_call.1} parent=23 // pred_check_branch
          %148 = sbr.rel (%p146) target = $region28
        $region27: #{tpu_custom_call.1} parent=23 // pred_region
          %s149 = sand.u32 %s26, 1
          %s150 = scalar_lea.sflag [#allocation3], %s149
          %s151 = sand.u32 %s26, 1
          %s152 = smul.addr %s151, 32
          %s153 = scalar_lea.vmem [#allocation2], %s152
          %155 = vsyncadd %s150, 0
          %s156 = smul.addr %s16, 4
          %s157 = smul.addr %s156, 8
          %s158 = scalar_lea.hbm %s0, %s157
          %s160 = sshll.u32 %s158, 4
          %s161 = int_to_ptr.hbm [resolvable:$true] %s160
          %s162 = sshll.u32 %s153, 4
          %s163 = int_to_ptr.vmem [resolvable:$true] %s162
          %165 = dma.hbm_to_vmem [thread:$0]  %s161, 512, %s163, %s150
        $region28: #{tpu_custom_call.1} parent=23 // pred_fallthru
          _
      $region24: #{tpu_custom_call.1} parent=5 // pred_fallthru
        _
      %p166 = scmp.le.s32.totalorder 1, %s16
      %p167 = scmp.lt.s32.totalorder %s16, 5
      %p168 = pnand %p166, %p167
      %p169 = pneg %p168
      // Predicated region
      $region29: #{tpu_custom_call.1} parent=5 // pred_check
        _
      $region30: #{tpu_custom_call.1} parent=5 // pred_check_branch
        %171 = sbr.rel (%p168) target = $region32
      $region31: #{tpu_custom_call.1} parent=5 // pred_region
        %s172 = ssub.s32 %s16, 1
        %s173 = sand.u32 %s29, 1
        %s174 = scalar_lea.sflag [#allocation3], %s173
        %s175 = sand.u32 %s29, 1
        %s176 = smul.addr %s175, 32
        %s177 = scalar_lea.vmem [#allocation2], %s176
        // Predicated region
        $region33: #{tpu_custom_call.1} parent=31 // pred_check
          %p178 = pneg %p42
        $region34: #{tpu_custom_call.1} parent=31 // pred_check_branch
          %180 = sbr.rel (%p178) target = $region36
        $region35: #{tpu_custom_call.1} parent=31 // pred_region
          %182 = dma.done %s174, 512
        $region36: #{tpu_custom_call.1} parent=31 // pred_fallthru
          _
        // Predicated region
        $region37: #{tpu_custom_call.1} parent=31 // pred_check
          %p183 = pneg %p63
        $region38: #{tpu_custom_call.1} parent=31 // pred_check_branch
          %185 = sbr.rel (%p183) target = $region40
        $region39: #{tpu_custom_call.1} parent=31 // pred_region
          %187 = dma.done [#allocation6], 8192
        $region40: #{tpu_custom_call.1} parent=31 // pred_fallthru
          _
        %s188 = sand.u32 %s29, 1
        %s189 = scalar_lea.sflag [#allocation3], %s188
        %s190 = sand.u32 %s29, 1
        %s191 = smul.addr %s190, 32
        %s192 = scalar_lea.vmem [#allocation2], %s191
        %p193 = pneg %p42
        %p194 = pneg %p39
        %p195 = pneg %p63
        %p196 = pneg %p60
        %p197 = pneg %p84
        %p198 = pneg %p81
        %p199 = pneg %p110
        %p200 = pneg %p107
        %s201 = sand.u32 %s97, 1
        %s202 = scalar_lea.sflag [#allocation4], %s201
        %s203 = sand.u32 %s97, 1
        %s204 = smul.addr %s203, 8
        %s205 = scalar_lea.vmem [#allocation7], %s204
        %v206 = vld [vmem:[%s177] sm:$0xff]
        %v207 = vld [vmem:[%s177 + $0x8] sm:$0xff]
        %v208 = vld [vmem:[%s177 + $0x10] sm:$0xff]
        %v209 = vld [vmem:[%s177 + $0x18] sm:$0xff]
        %v210 = vld [vmem:[#allocation5] sm:$0xff]
        %v211 = vld [vmem:[#allocation5 + $0x8] sm:$0xff]
        %v212 = vld [vmem:[#allocation5 + $0x10] sm:$0xff]
        %v213 = vld [vmem:[#allocation5 + $0x18] sm:$0xff]
        %v214 = vld [vmem:[#allocation5 + $0x20] sm:$0xff]
        %v215 = vld [vmem:[#allocation5 + $0x28] sm:$0xff]
        %v216 = vld [vmem:[#allocation5 + $0x30] sm:$0xff]
        %v217 = vld [vmem:[#allocation5 + $0x38] sm:$0xff]
        %v218 = vld [vmem:[#allocation5 + $0x40] sm:$0xff]
        %v219 = vld [vmem:[#allocation5 + $0x48] sm:$0xff]
        %v220 = vld [vmem:[#allocation5 + $0x50] sm:$0xff]
        %v221 = vld [vmem:[#allocation5 + $0x58] sm:$0xff]
        %v222 = vld [vmem:[#allocation5 + $0x60] sm:$0xff]
        %v223 = vld [vmem:[#allocation5 + $0x68] sm:$0xff]
        %v224 = vld [vmem:[#allocation5 + $0x70] sm:$0xff]
        %v225 = vld [vmem:[#allocation5 + $0x78] sm:$0xff]
        %v226 = vld [vmem:[#allocation5 + $0x80] sm:$0xff]
        %v227 = vld [vmem:[#allocation5 + $0x88] sm:$0xff]
        %v228 = vld [vmem:[#allocation5 + $0x90] sm:$0xff]
        %v229 = vld [vmem:[#allocation5 + $0x98] sm:$0xff]
        %v230 = vld [vmem:[#allocation5 + $0xa0] sm:$0xff]
        %v231 = vld [vmem:[#allocation5 + $0xa8] sm:$0xff]
        %v232 = vld [vmem:[#allocation5 + $0xb0] sm:$0xff]
        %v233 = vld [vmem:[#allocation5 + $0xb8] sm:$0xff]
        %v234 = vld [vmem:[#allocation5 + $0xc0] sm:$0xff]
        %v235 = vld [vmem:[#allocation5 + $0xc8] sm:$0xff]
        %v236 = vld [vmem:[#allocation5 + $0xd0] sm:$0xff]
        %v237 = vld [vmem:[#allocation5 + $0xd8] sm:$0xff]
        %v238 = vld [vmem:[#allocation5 + $0xe0] sm:$0xff]
        %v239 = vld [vmem:[#allocation5 + $0xe8] sm:$0xff]
        %v240 = vld [vmem:[#allocation5 + $0xf0] sm:$0xff]
        %v241 = vld [vmem:[#allocation5 + $0xf8] sm:$0xff]
        %v242 = vld [vmem:[#allocation5 + $0x100] sm:$0xff]
        %v243 = vld [vmem:[#allocation5 + $0x108] sm:$0xff]
        %v244 = vld [vmem:[#allocation5 + $0x110] sm:$0xff]
        %v245 = vld [vmem:[#allocation5 + $0x118] sm:$0xff]
        %v246 = vld [vmem:[#allocation5 + $0x120] sm:$0xff]
        %v247 = vld [vmem:[#allocation5 + $0x128] sm:$0xff]
        %v248 = vld [vmem:[#allocation5 + $0x130] sm:$0xff]
        %v249 = vld [vmem:[#allocation5 + $0x138] sm:$0xff]
        %v250 = vld [vmem:[#allocation5 + $0x140] sm:$0xff]
        %v251 = vld [vmem:[#allocation5 + $0x148] sm:$0xff]
        %v252 = vld [vmem:[#allocation5 + $0x150] sm:$0xff]
        %v253 = vld [vmem:[#allocation5 + $0x158] sm:$0xff]
        %v254 = vld [vmem:[#allocation5 + $0x160] sm:$0xff]
        %v255 = vld [vmem:[#allocation5 + $0x168] sm:$0xff]
        %v256 = vld [vmem:[#allocation5 + $0x170] sm:$0xff]
        %v257 = vld [vmem:[#allocation5 + $0x178] sm:$0xff]
        %v258 = vld [vmem:[#allocation5 + $0x180] sm:$0xff]
        %v259 = vld [vmem:[#allocation5 + $0x188] sm:$0xff]
        %v260 = vld [vmem:[#allocation5 + $0x190] sm:$0xff]
        %v261 = vld [vmem:[#allocation5 + $0x198] sm:$0xff]
        %v262 = vld [vmem:[#allocation5 + $0x1a0] sm:$0xff]
        %v263 = vld [vmem:[#allocation5 + $0x1a8] sm:$0xff]
        %v264 = vld [vmem:[#allocation5 + $0x1b0] sm:$0xff]
        %v265 = vld [vmem:[#allocation5 + $0x1b8] sm:$0xff]
        %v266 = vld [vmem:[#allocation5 + $0x1c0] sm:$0xff]
        %v267 = vld [vmem:[#allocation5 + $0x1c8] sm:$0xff]
        %v268 = vld [vmem:[#allocation5 + $0x1d0] sm:$0xff]
        %v269 = vld [vmem:[#allocation5 + $0x1d8] sm:$0xff]
        %v270 = vld [vmem:[#allocation5 + $0x1e0] sm:$0xff]
        %v271 = vld [vmem:[#allocation5 + $0x1e8] sm:$0xff]
        %v272 = vld [vmem:[#allocation5 + $0x1f0] sm:$0xff]
        %v273 = vld [vmem:[#allocation5 + $0x1f8] sm:$0xff]
        %v274 = vld [vmem:[%s2] sm:$0x1]
        %v276 = vperm.slane %v274, 0
        %278 = vmatpush.msra.mxu0 %v225
        %279 = vmatpush.msra.mxu0 %v224
        %280 = vmatpush.msra.mxu0 %v223
        %281 = vmatpush.msra.mxu0 %v222
        %282 = vmatpush.msra.mxu0 %v221
        %283 = vmatpush.msra.mxu0 %v220
        %284 = vmatpush.msra.mxu0 %v219
        %285 = vmatpush.msra.mxu0 %v218
        %286 = vmatpush.msra.mxu0 %v217
        %287 = vmatpush.msra.mxu0 %v216
        %288 = vmatpush.msra.mxu0 %v215
        %289 = vmatpush.msra.mxu0 %v214
        %290 = vmatpush.msra.mxu0 %v213
        %291 = vmatpush.msra.mxu0 %v212
        %292 = vmatpush.msra.mxu0 %v211
        %293 = vmatpush.msra.mxu0 %v210
        %294 = vmatmul.f32.gmra.mxu0 %v206
        %v295 = vpop.f32.mrf.mxu0
        %v296 = vadd.f32 %v276, %v295
        %297 = vdwg.mxu0
        %298 = vmatpush.msra.mxu0 %v241
        %299 = vmatpush.msra.mxu0 %v240
        %300 = vmatpush.msra.mxu0 %v239
        %301 = vmatpush.msra.mxu0 %v238
        %302 = vmatpush.msra.mxu0 %v237
        %303 = vmatpush.msra.mxu0 %v236
        %304 = vmatpush.msra.mxu0 %v235
        %305 = vmatpush.msra.mxu0 %v234
        %306 = vmatpush.msra.mxu0 %v233
        %307 = vmatpush.msra.mxu0 %v232
        %308 = vmatpush.msra.mxu0 %v231
        %309 = vmatpush.msra.mxu0 %v230
        %310 = vmatpush.msra.mxu0 %v229
        %311 = vmatpush.msra.mxu0 %v228
        %312 = vmatpush.msra.mxu0 %v227
        %313 = vmatpush.msra.mxu0 %v226
        %314 = vmatmul.f32.gmra.mxu0 %v207
        %v315 = vpop.f32.mrf.mxu0
        %v316 = vadd.f32 %v296, %v315
        %317 = vdwg.mxu0
        %318 = vmatpush.msra.mxu0 %v257
        %319 = vmatpush.msra.mxu0 %v256
        %320 = vmatpush.msra.mxu0 %v255
        %321 = vmatpush.msra.mxu0 %v254
        %322 = vmatpush.msra.mxu0 %v253
        %323 = vmatpush.msra.mxu0 %v252
        %324 = vmatpush.msra.mxu0 %v251
        %325 = vmatpush.msra.mxu0 %v250
        %326 = vmatpush.msra.mxu0 %v249
        %327 = vmatpush.msra.mxu0 %v248
        %328 = vmatpush.msra.mxu0 %v247
        %329 = vmatpush.msra.mxu0 %v246
        %330 = vmatpush.msra.mxu0 %v245
        %331 = vmatpush.msra.mxu0 %v244
        %332 = vmatpush.msra.mxu0 %v243
        %333 = vmatpush.msra.mxu0 %v242
        %334 = vmatmul.f32.gmra.mxu0 %v208
        %v335 = vpop.f32.mrf.mxu0
        %v336 = vadd.f32 %v316, %v335
        %337 = vdwg.mxu0
        %338 = vmatpush.msra.mxu0 %v273
        %339 = vmatpush.msra.mxu0 %v272
        %340 = vmatpush.msra.mxu0 %v271
        %341 = vmatpush.msra.mxu0 %v270
        %342 = vmatpush.msra.mxu0 %v269
        %343 = vmatpush.msra.mxu0 %v268
        %344 = vmatpush.msra.mxu0 %v267
        %345 = vmatpush.msra.mxu0 %v266
        %346 = vmatpush.msra.mxu0 %v265
        %347 = vmatpush.msra.mxu0 %v264
        %348 = vmatpush.msra.mxu0 %v263
        %349 = vmatpush.msra.mxu0 %v262
        %350 = vmatpush.msra.mxu0 %v261
        %351 = vmatpush.msra.mxu0 %v260
        %352 = vmatpush.msra.mxu0 %v259
        %353 = vmatpush.msra.mxu0 %v258
        %354 = vmatmul.f32.gmra.mxu0 %v209
        %v355 = vpop.f32.mrf.mxu0
        %v356 = vadd.f32 %v336, %v355
        %357 = vdwg.mxu0
        %v358 = vmax.f32 %v356, -30.0
        %v359 = vmin.f32 %v358, 30.0
        %v360 = vsub.f32 0.0, %v359
        %v361 = vmul.f32 %v360, 1.442695
        %v362 = vpow.pop %v361
        %v363 = vadd.f32 %v362, 1.0
        %v364 = vrcp.pop %v363
        %v365 = vmul.f32 %v363, %v364
        %v366 = vsub.f32 2.0, %v365
        %v367 = vmul.f32 %v364, %v366
        %368 = vst [vmem:[%s205] sm:$0xff] %v367
        %s369 = sand.u32 %s97, 1
        %s370 = scalar_lea.sflag [#allocation4], %s369
        %s371 = sand.u32 %s97, 1
        %s372 = smul.addr %s371, 8
        %s373 = scalar_lea.vmem [#allocation7], %s372
        // Predicated region
        $region41: #{tpu_custom_call.1} parent=31 // pred_check
          %p374 = pneg %p107
        $region42: #{tpu_custom_call.1} parent=31 // pred_check_branch
          %376 = sbr.rel (%p374) target = $region44
        $region43: #{tpu_custom_call.1} parent=31 // pred_region
          %378 = vsyncadd %s370, 0
          %s379 = smul.addr %s21, 8
          %s380 = scalar_lea.hbm %s3, %s379
          %s382 = sshll.u32 %s373, 4
          %s383 = int_to_ptr.vmem [resolvable:$true] %s382
          %s384 = sshll.u32 %s380, 4
          %s385 = int_to_ptr.hbm [resolvable:$true] %s384
          %387 = dma.vmem_to_hbm [thread:$0]  %s383, 128, %s385, %s370
        $region44: #{tpu_custom_call.1} parent=31 // pred_fallthru
          _
      $region32: #{tpu_custom_call.1} parent=5 // pred_fallthru
        _
      %p388 = scmp.le.s32.totalorder 2, %s16
      // Predicated region
      $region45: #{tpu_custom_call.1} parent=5 // pred_check
        %p389 = pneg %p388
      $region46: #{tpu_custom_call.1} parent=5 // pred_check_branch
        %391 = sbr.rel (%p389) target = $region48
      $region47: #{tpu_custom_call.1} parent=5 // pred_region
        %s392 = ssub.s32 %s16, 2
        // Predicated region
        $region49: #{tpu_custom_call.1} parent=47 // pred_check
          %p393 = pneg %p113
        $region50: #{tpu_custom_call.1} parent=47 // pred_check_branch
          %395 = sbr.rel (%p393) target = $region52
        $region51: #{tpu_custom_call.1} parent=47 // pred_region
          %s396 = sand.u32 %s98, 1
          %s397 = scalar_lea.sflag [#allocation4], %s396
          %s398 = sand.u32 %s98, 1
          %s399 = smul.addr %s398, 8
          %s400 = scalar_lea.vmem [#allocation7], %s399
          %402 = dma.done %s397, 128
        $region52: #{tpu_custom_call.1} parent=47 // pred_fallthru
          _
      $region48: #{tpu_custom_call.1} parent=5 // pred_fallthru
        _
    $region6: #{tpu_custom_call.1} parent=1 // loop_footer
      %s20 = sadd.s32 1, %s16
    $region7: #{tpu_custom_call.1} parent=1 // loop_footer_branch
      %15 = sbr.rel target = $region3
    $region8: #{tpu_custom_call.1} parent=1 // loop_exit
      _
    %403 = vsyncpa [#allocation3], 1
    %s404 = scalar_lea.sflag [#allocation3], 1
    %405 = vsyncpa %s404, 1
    %406 = vsyncpa [#allocation6], 1
    %407 = vsyncpa [#allocation4], 1
    %s408 = scalar_lea.sflag [#allocation4], 1
    %409 = vsyncpa %s408, 1

</llo_original>
